<compile_context>
chip_gen: v5e
topology: v5e:2x2
jax: 0.10.0
libtpu: 0.0.40
codegen_flags: <defaults>
</compile_context>

<pallas_src>
import functools
import math

import jax
import jax.numpy as jnp
from jax.experimental import pallas as pl
from jax.experimental.pallas import tpu as pltpu


_SUBLANE = {4: 8, 2: 16, 1: 32}


def _lane_group_partials(x_ref, *, hw, col_base, mask_tail):
    """Reduce a (rows, cols) tile to (rows, 128) per-lane max / f32-sum partials.

    Only VPU elementwise ops; the cross-lane (XLU) reduce is deferred to the
    caller's finalize.  The lane tail (global column >= hw) can only live in
    the last 128-lane group of a chunk, so only that group pays a mask.
    """
    rows, cols = x_ref.shape
    n_groups = cols // 128

    def group(g):
        xg = x_ref[:, g * 128:(g + 1) * 128]
        if mask_tail and g == n_groups - 1:
            col = col_base + g * 128 + jax.lax.broadcasted_iota(
                jnp.int32, (rows, 128), 1)
            valid = col < hw
            xm = jnp.where(valid, xg, -jnp.inf)                 # weak scalar: keeps dtype
            xs = jnp.where(valid, xg.astype(jnp.float32), 0.0)
        else:
            xm = xg
            xs = xg.astype(jnp.float32)
        return xm, xs

    pmax, psum = group(0)
    for g in range(1, n_groups):
        xm, xs = group(g)
        pmax = jnp.maximum(pmax, xm)
        psum = psum + xs
    return pmax, psum


def _pool_single_kernel(x_ref, max_ref, avg_ref, *, hw, inv_hw, mask_tail):
    """Fast path: whole (padded) H*W in one chunk; no scratch, no pl.when."""
    pmax, psum = _lane_group_partials(x_ref, hw=hw, col_base=0,
                                      mask_tail=mask_tail)
    max_ref[...] = jnp.max(pmax, axis=-1, keepdims=True).astype(max_ref.dtype)
    avg_ref[...] = (jnp.sum(psum, axis=-1, keepdims=True)
                    * inv_hw).astype(avg_ref.dtype)


def _pool_acc_kernel(x_ref, max_ref, avg_ref, max_acc, sum_acc, *,
                     hw, cols, inv_hw, mask_tail):
    """Multi-chunk path: per-lane running accumulators, finalize at last k."""
    k = pl.program_id(1)

    @pl.when(k == 0)
    def _init():
        max_acc[...] = jnp.full_like(max_acc, -jnp.inf)
        sum_acc[...] = jnp.zeros_like(sum_acc)

    pmax, psum = _lane_group_partials(x_ref, hw=hw, col_base=k * cols,
                                      mask_tail=mask_tail)
    max_acc[...] = jnp.maximum(max_acc[...], pmax)
    sum_acc[...] = sum_acc[...] + psum

    @pl.when(k == pl.num_programs(1) - 1)
    def _finalize():
        max_ref[...] = jnp.max(max_acc[...], axis=-1,
                               keepdims=True).astype(max_ref.dtype)
        avg_ref[...] = (jnp.sum(sum_acc[...], axis=-1, keepdims=True)
                        * inv_hw).astype(avg_ref.dtype)


def _choose_tiles(nc, hw_pad, itemsize, max_buffer_bytes, target_row_blocks):
    """Pick (rows, cols): lane-dense, budget-bound, enough row blocks."""
    sublane = _SUBLANE.get(itemsize, 8)

    def fits(c, r):
        return r * c * itemsize <= max_buffer_bytes

    # Lane (reduction) chunk: prefer full padded H*W; split only when a
    # minimal sublane-high tile would not fit.  Chunks are 128-multiples that
    # divide hw_pad exactly, so the only OOB lanes ever seen are the < 128
    # pad lanes of the final chunk.
    cols = hw_pad
    if not fits(cols, sublane):
        cols = 128
        c = 256
        while c <= hw_pad:
            if hw_pad % c == 0 and fits(c, sublane):
                cols = c
            c += 128

    # Row tile: as big as the budget allows, but capped so the "parallel"
    # axis keeps >= target_row_blocks blocks (v7x dual-TensorCore sharding +
    # pipeline overlap).
    rows_budget = max(sublane,
                      (max_buffer_bytes // (cols * itemsize)) // sublane * sublane)
    rows_cap = max(sublane,
                   math.ceil(math.ceil(nc / target_row_blocks) / sublane) * sublane)
    rows_full = math.ceil(nc / sublane) * sublane
    rows = min(rows_budget, rows_cap, rows_full)
    return rows, cols


def cls_layer_forward(x, *, max_buffer_bytes=2 * 1024 * 1024,
                      target_row_blocks=8, jnp_fallback_bytes=256 * 1024):
    """x: (N, C, H, W).  Returns (max_pool, avg_pool), each (N, C, 1, 1)."""
    N, C, H, W = x.shape
    nc, hw = N * C, H * W
    itemsize = x.dtype.itemsize

    # Tiny inputs: launch + per-grid-step overhead dominates; XLA's fused
    # reduction is already at roofline.  Set jnp_fallback_bytes=0 to force
    # the Pallas path.
    if nc * hw * itemsize <= jnp_fallback_bytes:
        return (jnp.max(x, axis=(2, 3), keepdims=True),
                jnp.mean(x.astype(jnp.float32), axis=(2, 3),
                         keepdims=True).astype(x.dtype))

    x2d = x.reshape(nc, hw)
    hw_pad = math.ceil(hw / 128) * 128
    mask_tail = hw_pad != hw
    inv_hw = 1.0 / hw

    rows, cols = _choose_tiles(nc, hw_pad, itemsize, max_buffer_bytes,
                               target_row_blocks)
    row_blocks = math.ceil(nc / rows)
    num_k = hw_pad // cols

    if num_k == 1:
        kernel = functools.partial(_pool_single_kernel, hw=hw, inv_hw=inv_hw,
                                   mask_tail=mask_tail)
        grid = (row_blocks,)
        in_specs = [pl.BlockSpec((rows, cols), lambda i: (i, 0))]
        out_spec = pl.BlockSpec((rows, 1), lambda i: (i, 0))
        scratch_shapes = ()
        dim_sem = ("parallel",)
        scratch_bytes = 0
    else:
        kernel = functools.partial(_pool_acc_kernel, hw=hw, cols=cols,
                                   inv_hw=inv_hw, mask_tail=mask_tail)
        grid = (row_blocks, num_k)
        in_specs = [pl.BlockSpec((rows, cols), lambda i, k: (i, k))]
        out_spec = pl.BlockSpec((rows, 1), lambda i, k: (i, 0))
        scratch_shapes = (pltpu.VMEM((rows, 128), x.dtype),      # running max (exact in-dtype)
                          pltpu.VMEM((rows, 128), jnp.float32))  # running sum (f32)
        dim_sem = ("parallel", "arbitrary")
        scratch_bytes = rows * 128 * (itemsize + 4)

    # vmem limit derived from the actual tiles (double-buffered input) so the
    # kernel stays well inside v7x's 64 MiB / v5e's 16 MiB-default VMEM.
    tile_bytes = rows * cols * itemsize
    out_bytes = 2 * 2 * rows * max(itemsize, 4)
    vmem_limit = int(min(32 * 2**20,
                         max(12 * 2**20,
                             2 * tile_bytes + scratch_bytes + out_bytes
                             + 4 * 2**20)))

    max_out, avg_out = pl.pallas_call(
        kernel,
        out_shape=(jax.ShapeDtypeStruct((nc, 1), x.dtype),
                   jax.ShapeDtypeStruct((nc, 1), x.dtype)),
        grid_spec=pltpu.PrefetchScalarGridSpec(
            num_scalar_prefetch=0,
            grid=grid,
            in_specs=in_specs,
            out_specs=(out_spec, out_spec),
            scratch_shapes=scratch_shapes),
        compiler_params=pltpu.CompilerParams(
            dimension_semantics=dim_sem,
            vmem_limit_bytes=vmem_limit),
        cost_estimate=pl.CostEstimate(
            flops=2 * nc * hw,
            transcendentals=0,
            bytes_accessed=nc * hw * itemsize + 2 * nc * itemsize),
    )(x2d)

    return max_out.reshape(N, C, 1, 1), avg_out.reshape(N, C, 1, 1)


def _ref_pools(x):
    return (jnp.max(x, axis=(2, 3), keepdims=True),
            jnp.mean(x.astype(jnp.float32), axis=(2, 3), keepdims=True))


if __name__ == "__main__":
    # 1) Primary test: small shape, force the Pallas path (single-chunk fast
    #    path, hw = 256 is lane-aligned).
    x = jax.random.normal(jax.random.PRNGKey(0), (2, 4, 16, 16), jnp.float32)
    max_p, avg_p = cls_layer_forward(x, jnp_fallback_bytes=0)
    jax.block_until_ready((max_p, avg_p))
    ref_max, ref_avg = _ref_pools(x)
    assert max_p.shape == (2, 4, 1, 1) and avg_p.shape == (2, 4, 1, 1)
    assert jnp.allclose(max_p, ref_max, atol=1e-6)
    assert jnp.allclose(avg_p, ref_avg.astype(x.dtype), atol=1e-5)

    # 2) Multi-chunk accumulator path + partial last row block (tiny budget).
    x2 = jax.random.normal(jax.random.PRNGKey(1), (2, 5, 16, 16), jnp.float32)
    m2, a2 = cls_layer_forward(x2, max_buffer_bytes=4096, jnp_fallback_bytes=0)
    jax.block_until_ready((m2, a2))
    r2m, r2a = _ref_pools(x2)
    assert jnp.allclose(m2, r2m, atol=1e-6)
    assert jnp.allclose(a2, r2a.astype(x2.dtype), atol=1e-5)

    # 3) Unaligned H*W (= 300): lane-tail masking, single-chunk and
    #    multi-chunk variants.
    x3 = jax.random.normal(jax.random.PRNGKey(2), (2, 5, 15, 20), jnp.float32)
    r3m, r3a = _ref_pools(x3)
    m3, a3 = cls_layer_forward(x3, jnp_fallback_bytes=0)
    m3b, a3b = cls_layer_forward(x3, max_buffer_bytes=4096, jnp_fallback_bytes=0)
    jax.block_until_ready((m3, a3, m3b, a3b))
    for m, a in ((m3, a3), (m3b, a3b)):
        assert jnp.allclose(m, r3m, atol=1e-6)
        assert jnp.allclose(a, r3a.astype(x3.dtype), atol=1e-5)

    # 4) bf16 input: max stays exact in bf16, sum accumulated in f32.
    x4 = jax.random.normal(jax.random.PRNGKey(3), (2, 16, 16, 16),
                           jnp.float32).astype(jnp.bfloat16)
    m4, a4 = cls_layer_forward(x4, jnp_fallback_bytes=0)
    jax.block_until_ready((m4, a4))
    r4m, r4a = _ref_pools(x4)
    assert jnp.array_equal(m4, r4m)
    assert jnp.allclose(a4.astype(jnp.float32), r4a, atol=1e-2)

    # 5) Tiny-input jnp fallback (default threshold) still matches.
    m5, a5 = cls_layer_forward(x)
    jax.block_until_ready((m5, a5))
    assert jnp.allclose(m5, ref_max, atol=1e-6)
    assert jnp.allclose(a5, ref_avg.astype(x.dtype), atol=1e-5)

    print("KERNEL_OK")
</pallas_src>

<mosaic_0001>
module attributes {stable_mosaic.version = 11 : i64} {
  func.func @_pool_single_kernel(%arg0: i32, %arg1: memref<8x256xf32, #tpu.memory_space<vmem>>, %arg2: memref<8x1xf32, #tpu.memory_space<vmem>>, %arg3: memref<8x1xf32, #tpu.memory_space<vmem>>) attributes {dimension_semantics = [#tpu.dimension_semantics<parallel>], iteration_bounds = array<i64: 1>, scalar_prefetch = 0 : i64, scratch_operands = 0 : i64, tpu.core_type = #tpu.core_type<tc>, window_params = [{transform_indices = @transform_0, window_bounds = array<i64: 8, 256>}, {transform_indices = @transform_1, window_bounds = array<i64: 8, 1>}, {transform_indices = @transform_2, window_bounds = array<i64: 8, 1>}]} {
    %c0 = arith.constant 0 : index
    %c0_0 = arith.constant 0 : index
    %0 = vector.load %arg1[%c0, %c0_0] : memref<8x256xf32, #tpu.memory_space<vmem>>, vector<8x128xf32>
    %c0_1 = arith.constant 0 : index
    %c128 = arith.constant 128 : index
    %1 = vector.load %arg1[%c0_1, %c128] : memref<8x256xf32, #tpu.memory_space<vmem>>, vector<8x128xf32>
    %2 = arith.maximumf %0, %1 : vector<8x128xf32>
    %3 = arith.addf %0, %1 : vector<8x128xf32>
    %cst = arith.constant dense<0xFF800000> : vector<8xf32>
    %4 = vector.multi_reduction <maximumf>, %2, %cst [1] : vector<8x128xf32> to vector<8xf32>
    %5 = vector.shape_cast %4 : vector<8xf32> to vector<8x1xf32>
    %c0_2 = arith.constant 0 : index
    %c0_3 = arith.constant 0 : index
    %6 = vector.load %arg2[%c0_2, %c0_3] : memref<8x1xf32, #tpu.memory_space<vmem>>, vector<8x1xf32>
    tpu.vector_store %arg2[%c0_2, %c0_3], %5 {strides = array<i32>} : memref<8x1xf32, #tpu.memory_space<vmem>>, vector<8x1xf32>,
    %cst_4 = arith.constant dense<0.000000e+00> : vector<8xf32>
    %7 = vector.multi_reduction <add>, %3, %cst_4 [1] : vector<8x128xf32> to vector<8xf32>
    %8 = vector.shape_cast %7 : vector<8xf32> to vector<8x1xf32>
    %cst_5 = arith.constant 3.906250e-03 : f32
    %9 = vector.broadcast %cst_5 : f32 to vector<8x1xf32>
    %10 = arith.mulf %8, %9 : vector<8x1xf32>
    %c0_6 = arith.constant 0 : index
    %c0_7 = arith.constant 0 : index
    %11 = vector.load %arg3[%c0_6, %c0_7] : memref<8x1xf32, #tpu.memory_space<vmem>>, vector<8x1xf32>
    tpu.vector_store %arg3[%c0_6, %c0_7], %10 {strides = array<i32>} : memref<8x1xf32, #tpu.memory_space<vmem>>, vector<8x1xf32>,
    return
  }
  func.func @transform_0(%arg0: i32) -> (i32, i32) {
    %c0_i32 = arith.constant 0 : i32
    %c0_i32_0 = arith.constant 0 : i32
    return %arg0, %c0_i32 : i32, i32
  }
  func.func @transform_1(%arg0: i32) -> (i32, i32) {
    %c0_i32 = arith.constant 0 : i32
    %c0_i32_0 = arith.constant 0 : i32
    return %arg0, %c0_i32 : i32, i32
  }
  func.func @transform_2(%arg0: i32) -> (i32, i32) {
    %c0_i32 = arith.constant 0 : i32
    %c0_i32_0 = arith.constant 0 : i32
    return %arg0, %c0_i32 : i32, i32
  }
}

</mosaic_0001>

<llo_original>
// kernel: tpu_custom_call.1
$region0: #{tpu_custom_call.1}
  #allocation0 [shape = 'u32[]', space=smem, size = 0x4, offset = 0x4, fixed_abs, tag = 'smem constant byte address 0x4 - core index']
  #allocation1 [shape = 'u32[72,128]{1,0:T(1,128)}', space=vmem, size = 0x9000, scoped, tag = 'internal scratch']
  %s0 = inlined_call_operand.hbm [shape: f32[8,256], index: 0, kind: input, shape index: {}]
  %s1 = inlined_call_operand.vmem [shape: f32[8,1], index: 1, kind: output, shape index: {0}]
  %s2 = inlined_call_operand.vmem [shape: f32[8,1], index: 2, kind: output, shape index: {1}]
  %3 = xla_tuple %s1, %s2
  %s4 = sld [smem:[#allocation0]]
  $region26: #{tpu_custom_call.1} parent=0
    _
  %s6 = ssub.s32 1, %s4
  %s7 = scalar_select 0, %s6, %s4
  $region1: #{tpu_custom_call.1} parent=0
    #allocation2 [shape = 'u8[8192]{0}', space=vmem, size = 0x2000, scoped, tag = 'input window, operand 0, single buffered']
    #allocation3 [shape = 's32[1]{0}', space=sflag, size = 0x4, scoped, tag = 'scoped memory for tpu_custom_call.1']
    %8 = vsyncpa [#allocation3], 0
    // Predicated region
    $region2: #{tpu_custom_call.1} parent=1 // pred_check
      _
    $region3: #{tpu_custom_call.1} parent=1 // pred_check_branch
      %10 = sbr.rel (0) target = $region5
    $region4: #{tpu_custom_call.1} parent=1 // pred_region
      %12 = vsyncadd [#allocation3], 0
      %s14 = sshll.u32 %s0, 4
      %s15 = int_to_ptr.hbm [resolvable:$true] %s14
      %s16 = sshll.u32 [#allocation2], 4
      %s17 = int_to_ptr.vmem [resolvable:$true] %s16
      %19 = dma.hbm_to_vmem [thread:$0]  %s15, 256, %s17, [#allocation3]
    $region5: #{tpu_custom_call.1} parent=1 // pred_fallthru
      _
    // Predicated region
    $region6: #{tpu_custom_call.1} parent=1 // pred_check
      _
    $region7: #{tpu_custom_call.1} parent=1 // pred_check_branch
      %21 = sbr.rel (0) target = $region9
    $region8: #{tpu_custom_call.1} parent=1 // pred_region
      %23 = dma.done [#allocation3], 256
    $region9: #{tpu_custom_call.1} parent=1 // pred_fallthru
      _
    %v24 = vld [vmem:[#allocation2] sm:$0xff]
    %v25 = vld [vmem:[#allocation2 + $0x8] sm:$0xff]
    %v26 = vmax.f32 %v24, %v25
    %v27 = vadd.f32 %v24, %v25
    %28 = vmax.xlane.f32.xlu0 %v26
    %v29 = vpop.xlane.xlu0 %28
    %vm30 = vcmask 7168
    %31 = vst.msk [vmem:[%s1] sm:$0xff] %vm30, %v29
    %32 = vadd.xlane.f32.xlu0 %v27
    %v33 = vpop.xlane.xlu0 %32
    %v34 = vmul.f32 %v33, 0.00390625
    %35 = vst.msk [vmem:[%s2] sm:$0xff] %vm30, %v34
    // Predicated region
    $region10: #{tpu_custom_call.1} parent=1 // pred_check
      _
    $region11: #{tpu_custom_call.1} parent=1 // pred_check_branch
      %37 = sbr.rel (0) target = $region13
    $region12: #{tpu_custom_call.1} parent=1 // pred_region
      _
    $region13: #{tpu_custom_call.1} parent=1 // pred_fallthru
      _
    // Predicated region
    $region14: #{tpu_custom_call.1} parent=1 // pred_check
      _
    $region15: #{tpu_custom_call.1} parent=1 // pred_check_branch
      %39 = sbr.rel (0) target = $region17
    $region16: #{tpu_custom_call.1} parent=1 // pred_region
      _
    $region17: #{tpu_custom_call.1} parent=1 // pred_fallthru
      _
    // Predicated region
    $region18: #{tpu_custom_call.1} parent=1 // pred_check
      _
    $region19: #{tpu_custom_call.1} parent=1 // pred_check_branch
      %41 = sbr.rel (0) target = $region21
    $region20: #{tpu_custom_call.1} parent=1 // pred_region
      _
    $region21: #{tpu_custom_call.1} parent=1 // pred_fallthru
      _
    // Predicated region
    $region22: #{tpu_custom_call.1} parent=1 // pred_check
      _
    $region23: #{tpu_custom_call.1} parent=1 // pred_check_branch
      %43 = sbr.rel (0) target = $region25
    $region24: #{tpu_custom_call.1} parent=1 // pred_region
      _
    $region25: #{tpu_custom_call.1} parent=1 // pred_fallthru
      _
    %44 = vsyncpa [#allocation3], 1

</llo_original>
